<compile_context>
chip_gen: v5e
topology: v5e:2x2
jax: 0.10.0
libtpu: 0.0.40
codegen_flags: <defaults>
</compile_context>

<pallas_src>
import functools

import jax
import jax.numpy as jnp
from jax import lax
from jax.experimental import pallas as pl
from jax.experimental.pallas import tpu as pltpu

SMOOTH = 1e-5
LANES = 128


def _round_up(x, m):
    return -(-x // m) * m


def _default_rows_block(n_classes, in_bytes, tgt_bytes, n_rows):
    """Rows (sublanes) per grid step: big streaming tiles, VMEM-safe on all gens."""
    if n_rows <= 32:
        return int(n_rows)                       # single exact (full-extent) block
    per_row_bytes = LANES * (n_classes * in_bytes + tgt_bytes)
    budget = 8 * 1024 * 1024                     # per buffer set; ~2x with double buffering
    rb = min(max(32, budget // per_row_bytes), 4096, _round_up(n_rows, 32))
    if rb >= 256:
        rb = (rb // 256) * 256                   # divisible by the 256-row inner chunk
    else:
        rb = (rb // 32) * 32                     # multiple of 32: dense for f32/bf16/int8
    return int(rb)


def _dice_kernel(score_ref, tgt_ref, acc_ref, *, n_classes, rows_block, chunk_rows,
                 n_chunks, tiles_per_core, hw_total, apply_softmax, needs_mask):
    b = pl.program_id(1)
    t = pl.program_id(2)

    @pl.when((b == 0) & (t == 0))
    def _init():
        acc_ref[...] = jnp.zeros_like(acc_ref)

    # Logical (unclamped) tile index -> first 128-lane row covered by this step.
    row0 = (pl.program_id(0) * tiles_per_core + t) * rows_block

    def chunk_body(ci):
        if isinstance(ci, int):
            r0 = ci * chunk_rows
        else:
            r0 = pl.multiple_of(ci * chunk_rows, chunk_rows)

        tg = tgt_ref[0, pl.ds(r0, chunk_rows), :].astype(jnp.int32)    # (ck, 128)

        if needs_mask:
            # Valid <=> flat pixel index < H*W.  Covers the 128-lane tail padding
            # AND garbage rows of partial / duplicated blocks (also keeps any
            # NaN/Inf from garbage data out of the sums via where-selects below).
            row = lax.broadcasted_iota(jnp.int32, (chunk_rows, LANES), 0)
            lane = lax.broadcasted_iota(jnp.int32, (chunk_rows, LANES), 1)
            valid = ((row0 + r0 + row) * LANES + lane) < hw_total
        else:
            valid = None

        # Native-dtype loads, f32 upcast in-kernel (v5e has no bf16 VALU).
        s_list = [score_ref[0, c, pl.ds(r0, chunk_rows), :].astype(jnp.float32)
                  for c in range(n_classes)]

        if apply_softmax:
            # Class axis is a leading/static axis: pure VALU max/sum across C
            # vreg arrays, one EUP exp per element, one reciprocal per pixel.
            m = s_list[0]
            for c in range(1, n_classes):
                m = jnp.maximum(m, s_list[c])
            e_list = [jnp.exp(s - m) for s in s_list]
            denom = e_list[0]
            for c in range(1, n_classes):
                denom = denom + e_list[c]
            inv = pl.reciprocal(denom, approx=False)
            s_list = [e * inv for e in e_list]

        for c in range(n_classes):
            s = s_list[c]
            match = tg == c                               # out-of-range labels never match
            if valid is not None:
                match = jnp.logical_and(match, valid)
                sz = jnp.where(valid, s, 0.0)             # mask padded/garbage score too
            else:
                sz = s
            inter_p = jnp.sum(jnp.where(match, s, 0.0), axis=0, keepdims=True)   # (1,128)
            z_p = jnp.sum(sz * sz, axis=0, keepdims=True)
            y_p = jnp.sum(match.astype(jnp.float32), axis=0, keepdims=True)
            acc_ref[0, 0, pl.ds(c, 1), :] += inter_p
            acc_ref[0, 1, pl.ds(c, 1), :] += z_p
            acc_ref[0, 2, pl.ds(c, 1), :] += y_p

    if n_chunks == 1:
        chunk_body(0)
    else:
        pl.loop(0, n_chunks)(chunk_body)


def dice_loss_pallas(inputs, target, weight, n_classes, softmax=False,
                     rows_block=None, n_split=None):
    """Matches DiceLoss.forward(inputs, target, softmax) -> scalar loss."""
    B, C, H, W = inputs.shape
    assert C == n_classes, "predict & target shape do not match"
    HW = H * W
    weight = jnp.asarray(weight, jnp.float32)

    score = inputs.reshape(B, C, HW)        # zero-copy view, NATIVE dtype (no astype)
    tgt = target.reshape(B, HW)             # native integer dtype (no astype)

    pad_cols = (-HW) % LANES
    if pad_cols:
        # Only when H*W isn't 128-aligned (rare): padded score columns are zeros,
        # padded labels are n_classes (match no class).
        score = jnp.pad(score, ((0, 0), (0, 0), (0, pad_cols)))
        tgt = jnp.pad(tgt, ((0, 0), (0, pad_cols)), constant_values=n_classes)
    R = (HW + pad_cols) // LANES
    score = score.reshape(B, C, R, LANES)   # zero-copy split of the last dim
    tgt = tgt.reshape(B, R, LANES)

    in_bytes = jnp.dtype(score.dtype).itemsize
    tgt_bytes = jnp.dtype(tgt.dtype).itemsize
    if rows_block is None:
        rows_block = _default_rows_block(C, in_bytes, tgt_bytes, R)
    chunk_rows = min(256, rows_block)
    if rows_block % chunk_rows:
        chunk_rows = rows_block
    n_chunks = rows_block // chunk_rows

    n_tiles = -(-R // rows_block)
    if n_split is None:
        # Megacore split: one partial-output block per core; harmless serial loop
        # on single-TC chips (v5e/v6e).  Use pltpu.CORE_PARALLEL on v7x if plain
        # "parallel" is observed not to shard across the two TensorCores.
        n_split = 2 if n_tiles >= 2 else 1
    tiles_per_core = -(-n_tiles // n_split)

    # Mask only when the grid covers rows past R (partial/duplicated blocks) or
    # when the softmax path would otherwise see the zero-padded lane tail.
    needs_mask = (n_split * tiles_per_core * rows_block > R) or (pad_cols > 0 and softmax)

    kernel = functools.partial(
        _dice_kernel, n_classes=C, rows_block=rows_block, chunk_rows=chunk_rows,
        n_chunks=n_chunks, tiles_per_core=tiles_per_core, hw_total=HW,
        apply_softmax=softmax, needs_mask=needs_mask)

    def tile_idx(c, t):
        return jnp.minimum(c * tiles_per_core + t, n_tiles - 1)

    parts = pl.pallas_call(
        kernel,
        out_shape=jax.ShapeDtypeStruct((n_split, 3, C, LANES), jnp.float32),
        grid_spec=pltpu.PrefetchScalarGridSpec(
            num_scalar_prefetch=0,
            grid=(n_split, B, tiles_per_core),
            in_specs=[
                pl.BlockSpec((1, C, rows_block, LANES),
                             lambda c, b, t: (b, 0, tile_idx(c, t), 0)),
                pl.BlockSpec((1, rows_block, LANES),
                             lambda c, b, t: (b, tile_idx(c, t), 0)),
            ],
            out_specs=pl.BlockSpec((1, 3, C, LANES),
                                   lambda c, b, t: (c, 0, 0, 0)),
        ),
        compiler_params=pltpu.CompilerParams(
            dimension_semantics=("parallel", "arbitrary", "arbitrary"),
            vmem_limit_bytes=40 * 1024 * 1024),
    )(score, tgt)

    sums = jnp.sum(parts, axis=(0, 3))      # (3, C): tiny final reduce outside the kernel
    intersect, z_sum, y_sum = sums[0], sums[1], sums[2]
    dice_loss = 1.0 - (2.0 * intersect + SMOOTH) / (z_sum + y_sum + SMOOTH)
    return jnp.sum(dice_loss * weight) / n_classes
    # TODO(synk): class_wise_dice uses .item() (host-side Python list, not returned) — omitted.


def _dice_ref(inputs, target, weight, n_classes, softmax=False):
    """Pure-JAX reference matching the PyTorch module."""
    if softmax:
        inputs = jax.nn.softmax(inputs, axis=1)
    onehot = (target[:, None, :, :] ==
              jnp.arange(n_classes)[None, :, None, None]).astype(jnp.float32)
    loss = 0.0
    for i in range(n_classes):
        s = inputs[:, i]
        t = onehot[:, i]
        inter = jnp.sum(s * t)
        y = jnp.sum(t * t)
        z = jnp.sum(s * s)
        d = 1.0 - (2.0 * inter + SMOOTH) / (z + y + SMOOTH)
        loss = loss + d * weight[i]
    return loss / n_classes


if __name__ == "__main__":
    key = jax.random.PRNGKey(0)
    k1, k2, k3, k4, k5, k6, k7 = jax.random.split(key, 7)

    B, C, H, W = 2, 4, 16, 16
    inputs = jax.random.uniform(k1, (B, C, H, W), dtype=jnp.float32)
    target = jax.random.randint(k2, (B, H, W), 0, C, dtype=jnp.int32)
    weight = jax.random.uniform(k3, (C,), dtype=jnp.float32)   # deterministic param init

    # 1) Main path: f32, no softmax, 128-aligned H*W (zero-copy view, no masking).
    loss = jax.block_until_ready(dice_loss_pallas(inputs, target, weight, n_classes=C))
    ref = _dice_ref(inputs, target, weight, C, softmax=False)
    assert jnp.allclose(loss, ref, rtol=1e-5, atol=1e-6), (float(loss), float(ref))

    # 2) Fused softmax + ragged H*W (17x17) + forced 2-way split (clamp + mask path).
    inputs2 = jax.random.normal(k4, (1, C, 17, 17), dtype=jnp.float32)
    target2 = jax.random.randint(k5, (1, 17, 17), 0, C, dtype=jnp.int32)
    loss2 = jax.block_until_ready(
        dice_loss_pallas(inputs2, target2, weight, n_classes=C, softmax=True, n_split=2))
    ref2 = _dice_ref(inputs2, target2, weight, C, softmax=True)
    assert jnp.allclose(loss2, ref2, rtol=1e-4, atol=1e-5), (float(loss2), float(ref2))

    # 3) Native-bf16 streaming path (in-kernel f32 upcast) + fused softmax.
    inputs3 = jax.random.normal(k6, (2, C, 64, 64), dtype=jnp.float32).astype(jnp.bfloat16)
    target3 = jax.random.randint(k7, (2, 64, 64), 0, C, dtype=jnp.int32)
    loss3 = jax.block_until_ready(
        dice_loss_pallas(inputs3, target3, weight, n_classes=C, softmax=True))
    ref3 = _dice_ref(inputs3.astype(jnp.float32), target3, weight, C, softmax=True)
    assert jnp.allclose(loss3, ref3, rtol=1e-4, atol=1e-5), (float(loss3), float(ref3))

    print("KERNEL_OK")
</pallas_src>

<mosaic_0001>
module attributes {stable_mosaic.version = 11 : i64} {
  func.func @_dice_kernel(%arg0: i32, %arg1: i32, %arg2: i32, %arg3: memref<1x4x2x128xf32, #tpu.memory_space<vmem>>, %arg4: memref<1x2x128xi32, #tpu.memory_space<vmem>>, %arg5: memref<1x3x4x128xf32, #tpu.memory_space<vmem>>) attributes {dimension_semantics = [#tpu.dimension_semantics<parallel>, #tpu.dimension_semantics<arbitrary>, #tpu.dimension_semantics<arbitrary>], iteration_bounds = array<i64: 1, 2, 1>, scalar_prefetch = 0 : i64, scratch_operands = 0 : i64, tpu.core_type = #tpu.core_type<tc>, window_params = [{transform_indices = @transform_0, window_bounds = array<i64: 1, 4, 2, 128>}, {transform_indices = @transform_1, window_bounds = array<i64: 1, 2, 128>}, {transform_indices = @transform_2, window_bounds = array<i64: 1, 3, 4, 128>}]} {
    %c0_i32 = arith.constant 0 : i32
    %0 = arith.cmpi eq, %arg1, %c0_i32 : i32
    %c0_i32_0 = arith.constant 0 : i32
    %1 = arith.cmpi eq, %arg2, %c0_i32_0 : i32
    %2 = arith.andi %0, %1 : i1
    %3 = arith.extui %2 : i1 to i32
    %c0_i32_1 = arith.constant 0 : i32
    %4 = arith.cmpi ne, %3, %c0_i32_1 : i32
    scf.if %4 {
      %cst_129 = arith.constant 0.000000e+00 : f32
      %139 = vector.broadcast %cst_129 : f32 to vector<1x3x4x128xf32>
      %c0_130 = arith.constant 0 : index
      %c0_131 = arith.constant 0 : index
      %c0_132 = arith.constant 0 : index
      %c0_133 = arith.constant 0 : index
      %140 = vector.load %arg5[%c0_130, %c0_131, %c0_132, %c0_133] : memref<1x3x4x128xf32, #tpu.memory_space<vmem>>, vector<1x3x4x128xf32>
      tpu.vector_store %arg5[%c0_130, %c0_131, %c0_132, %c0_133], %139 {strides = array<i32>} : memref<1x3x4x128xf32, #tpu.memory_space<vmem>>, vector<1x3x4x128xf32>,
    } else {
    }
    %c0 = arith.constant 0 : index
    %c0_2 = arith.constant 0 : index
    %c0_3 = arith.constant 0 : index
    %5 = vector.load %arg4[%c0, %c0_2, %c0_3] : memref<1x2x128xi32, #tpu.memory_space<vmem>>, vector<1x2x128xi32>
    %6 = vector.shape_cast %5 : vector<1x2x128xi32> to vector<2x128xi32>
    %c0_4 = arith.constant 0 : index
    %c0_5 = arith.constant 0 : index
    %c0_6 = arith.constant 0 : index
    %c0_7 = arith.constant 0 : index
    %7 = vector.load %arg3[%c0_4, %c0_5, %c0_6, %c0_7] : memref<1x4x2x128xf32, #tpu.memory_space<vmem>>, vector<1x1x2x128xf32>
    %8 = vector.shape_cast %7 : vector<1x1x2x128xf32> to vector<2x128xf32>
    %c0_8 = arith.constant 0 : index
    %c1 = arith.constant 1 : index
    %c0_9 = arith.constant 0 : index
    %c0_10 = arith.constant 0 : index
    %9 = vector.load %arg3[%c0_8, %c1, %c0_9, %c0_10] : memref<1x4x2x128xf32, #tpu.memory_space<vmem>>, vector<1x1x2x128xf32>
    %10 = vector.shape_cast %9 : vector<1x1x2x128xf32> to vector<2x128xf32>
    %c0_11 = arith.constant 0 : index
    %c2 = arith.constant 2 : index
    %c0_12 = arith.constant 0 : index
    %c0_13 = arith.constant 0 : index
    %11 = vector.load %arg3[%c0_11, %c2, %c0_12, %c0_13] : memref<1x4x2x128xf32, #tpu.memory_space<vmem>>, vector<1x1x2x128xf32>
    %12 = vector.shape_cast %11 : vector<1x1x2x128xf32> to vector<2x128xf32>
    %c0_14 = arith.constant 0 : index
    %c3 = arith.constant 3 : index
    %c0_15 = arith.constant 0 : index
    %c0_16 = arith.constant 0 : index
    %13 = vector.load %arg3[%c0_14, %c3, %c0_15, %c0_16] : memref<1x4x2x128xf32, #tpu.memory_space<vmem>>, vector<1x1x2x128xf32>
    %14 = vector.shape_cast %13 : vector<1x1x2x128xf32> to vector<2x128xf32>
    %c0_i32_17 = arith.constant 0 : i32
    %15 = vector.broadcast %c0_i32_17 : i32 to vector<2x128xi32>
    %16 = arith.cmpi eq, %6, %15 : vector<2x128xi32>
    %cst = arith.constant 0.000000e+00 : f32
    %17 = vector.broadcast %cst : f32 to vector<2x128xf32>
    %18 = arith.select %16, %8, %17 : vector<2x128xi1>, vector<2x128xf32>
    %cst_18 = arith.constant dense<0.000000e+00> : vector<128xf32>
    %19 = vector.multi_reduction <add>, %18, %cst_18 [0] : vector<2x128xf32> to vector<128xf32>
    %20 = vector.shape_cast %19 : vector<128xf32> to vector<1x128xf32>
    %21 = arith.mulf %8, %8 : vector<2x128xf32>
    %cst_19 = arith.constant dense<0.000000e+00> : vector<128xf32>
    %22 = vector.multi_reduction <add>, %21, %cst_19 [0] : vector<2x128xf32> to vector<128xf32>
    %23 = vector.shape_cast %22 : vector<128xf32> to vector<1x128xf32>
    %24 = arith.extui %16 : vector<2x128xi1> to vector<2x128xi32>
    %25 = arith.sitofp %24 : vector<2x128xi32> to vector<2x128xf32>
    %cst_20 = arith.constant dense<0.000000e+00> : vector<128xf32>
    %26 = vector.multi_reduction <add>, %25, %cst_20 [0] : vector<2x128xf32> to vector<128xf32>
    %27 = vector.shape_cast %26 : vector<128xf32> to vector<1x128xf32>
    %c0_21 = arith.constant 0 : index
    %c0_22 = arith.constant 0 : index
    %c0_23 = arith.constant 0 : index
    %c0_24 = arith.constant 0 : index
    %28 = vector.load %arg5[%c0_21, %c0_22, %c0_23, %c0_24] : memref<1x3x4x128xf32, #tpu.memory_space<vmem>>, vector<1x1x1x128xf32>
    %29 = vector.shape_cast %28 : vector<1x1x1x128xf32> to vector<1x128xf32>
    %30 = arith.addf %29, %20 : vector<1x128xf32>
    %c0_25 = arith.constant 0 : index
    %c0_26 = arith.constant 0 : index
    %c0_27 = arith.constant 0 : index
    %c0_28 = arith.constant 0 : index
    %31 = vector.load %arg5[%c0_25, %c0_26, %c0_27, %c0_28] : memref<1x3x4x128xf32, #tpu.memory_space<vmem>>, vector<1x1x1x128xf32>
    %32 = vector.shape_cast %31 : vector<1x1x1x128xf32> to vector<1x128xf32>
    %33 = vector.shape_cast %30 : vector<1x128xf32> to vector<1x1x1x128xf32>
    tpu.vector_store %arg5[%c0_25, %c0_26, %c0_27, %c0_28], %33 {strides = array<i32>} : memref<1x3x4x128xf32, #tpu.memory_space<vmem>>, vector<1x1x1x128xf32>,
    %c0_29 = arith.constant 0 : index
    %c1_30 = arith.constant 1 : index
    %c0_31 = arith.constant 0 : index
    %c0_32 = arith.constant 0 : index
    %34 = vector.load %arg5[%c0_29, %c1_30, %c0_31, %c0_32] : memref<1x3x4x128xf32, #tpu.memory_space<vmem>>, vector<1x1x1x128xf32>
    %35 = vector.shape_cast %34 : vector<1x1x1x128xf32> to vector<1x128xf32>
    %36 = arith.addf %35, %23 : vector<1x128xf32>
    %c0_33 = arith.constant 0 : index
    %c1_34 = arith.constant 1 : index
    %c0_35 = arith.constant 0 : index
    %c0_36 = arith.constant 0 : index
    %37 = vector.load %arg5[%c0_33, %c1_34, %c0_35, %c0_36] : memref<1x3x4x128xf32, #tpu.memory_space<vmem>>, vector<1x1x1x128xf32>
    %38 = vector.shape_cast %37 : vector<1x1x1x128xf32> to vector<1x128xf32>
    %39 = vector.shape_cast %36 : vector<1x128xf32> to vector<1x1x1x128xf32>
    tpu.vector_store %arg5[%c0_33, %c1_34, %c0_35, %c0_36], %39 {strides = array<i32>} : memref<1x3x4x128xf32, #tpu.memory_space<vmem>>, vector<1x1x1x128xf32>,
    %c0_37 = arith.constant 0 : index
    %c2_38 = arith.constant 2 : index
    %c0_39 = arith.constant 0 : index
    %c0_40 = arith.constant 0 : index
    %40 = vector.load %arg5[%c0_37, %c2_38, %c0_39, %c0_40] : memref<1x3x4x128xf32, #tpu.memory_space<vmem>>, vector<1x1x1x128xf32>
    %41 = vector.shape_cast %40 : vector<1x1x1x128xf32> to vector<1x128xf32>
    %42 = arith.addf %41, %27 : vector<1x128xf32>
    %c0_41 = arith.constant 0 : index
    %c2_42 = arith.constant 2 : index
    %c0_43 = arith.constant 0 : index
    %c0_44 = arith.constant 0 : index
    %43 = vector.load %arg5[%c0_41, %c2_42, %c0_43, %c0_44] : memref<1x3x4x128xf32, #tpu.memory_space<vmem>>, vector<1x1x1x128xf32>
    %44 = vector.shape_cast %43 : vector<1x1x1x128xf32> to vector<1x128xf32>
    %45 = vector.shape_cast %42 : vector<1x128xf32> to vector<1x1x1x128xf32>
    tpu.vector_store %arg5[%c0_41, %c2_42, %c0_43, %c0_44], %45 {strides = array<i32>} : memref<1x3x4x128xf32, #tpu.memory_space<vmem>>, vector<1x1x1x128xf32>,
    %c1_i32 = arith.constant 1 : i32
    %46 = vector.broadcast %c1_i32 : i32 to vector<2x128xi32>
    %47 = arith.cmpi eq, %6, %46 : vector<2x128xi32>
    %cst_45 = arith.constant 0.000000e+00 : f32
    %48 = vector.broadcast %cst_45 : f32 to vector<2x128xf32>
    %49 = arith.select %47, %10, %48 : vector<2x128xi1>, vector<2x128xf32>
    %cst_46 = arith.constant dense<0.000000e+00> : vector<128xf32>
    %50 = vector.multi_reduction <add>, %49, %cst_46 [0] : vector<2x128xf32> to vector<128xf32>
    %51 = vector.shape_cast %50 : vector<128xf32> to vector<1x128xf32>
    %52 = arith.mulf %10, %10 : vector<2x128xf32>
    %cst_47 = arith.constant dense<0.000000e+00> : vector<128xf32>
    %53 = vector.multi_reduction <add>, %52, %cst_47 [0] : vector<2x128xf32> to vector<128xf32>
    %54 = vector.shape_cast %53 : vector<128xf32> to vector<1x128xf32>
    %55 = arith.extui %47 : vector<2x128xi1> to vector<2x128xi32>
    %56 = arith.sitofp %55 : vector<2x128xi32> to vector<2x128xf32>
    %cst_48 = arith.constant dense<0.000000e+00> : vector<128xf32>
    %57 = vector.multi_reduction <add>, %56, %cst_48 [0] : vector<2x128xf32> to vector<128xf32>
    %58 = vector.shape_cast %57 : vector<128xf32> to vector<1x128xf32>
    %c0_49 = arith.constant 0 : index
    %c0_50 = arith.constant 0 : index
    %c1_51 = arith.constant 1 : index
    %c0_52 = arith.constant 0 : index
    %59 = vector.load %arg5[%c0_49, %c0_50, %c1_51, %c0_52] : memref<1x3x4x128xf32, #tpu.memory_space<vmem>>, vector<1x1x1x128xf32>
    %60 = vector.shape_cast %59 : vector<1x1x1x128xf32> to vector<1x128xf32>
    %61 = arith.addf %60, %51 : vector<1x128xf32>
    %c0_53 = arith.constant 0 : index
    %c0_54 = arith.constant 0 : index
    %c1_55 = arith.constant 1 : index
    %c0_56 = arith.constant 0 : index
    %62 = vector.load %arg5[%c0_53, %c0_54, %c1_55, %c0_56] : memref<1x3x4x128xf32, #tpu.memory_space<vmem>>, vector<1x1x1x128xf32>
    %63 = vector.shape_cast %62 : vector<1x1x1x128xf32> to vector<1x128xf32>
    %64 = vector.shape_cast %61 : vector<1x128xf32> to vector<1x1x1x128xf32>
    tpu.vector_store %arg5[%c0_53, %c0_54, %c1_55, %c0_56], %64 {strides = array<i32>} : memref<1x3x4x128xf32, #tpu.memory_space<vmem>>, vector<1x1x1x128xf32>,
    %c0_57 = arith.constant 0 : index
    %c1_58 = arith.constant 1 : index
    %c1_59 = arith.constant 1 : index
    %c0_60 = arith.constant 0 : index
    %65 = vector.load %arg5[%c0_57, %c1_58, %c1_59, %c0_60] : memref<1x3x4x128xf32, #tpu.memory_space<vmem>>, vector<1x1x1x128xf32>
    %66 = vector.shape_cast %65 : vector<1x1x1x128xf32> to vector<1x128xf32>
    %67 = arith.addf %66, %54 : vector<1x128xf32>
    %c0_61 = arith.constant 0 : index
    %c1_62 = arith.constant 1 : index
    %c1_63 = arith.constant 1 : index
    %c0_64 = arith.constant 0 : index
    %68 = vector.load %arg5[%c0_61, %c1_62, %c1_63, %c0_64] : memref<1x3x4x128xf32, #tpu.memory_space<vmem>>, vector<1x1x1x128xf32>
    %69 = vector.shape_cast %68 : vector<1x1x1x128xf32> to vector<1x128xf32>
    %70 = vector.shape_cast %67 : vector<1x128xf32> to vector<1x1x1x128xf32>
    tpu.vector_store %arg5[%c0_61, %c1_62, %c1_63, %c0_64], %70 {strides = array<i32>} : memref<1x3x4x128xf32, #tpu.memory_space<vmem>>, vector<1x1x1x128xf32>,
    %c0_65 = arith.constant 0 : index
    %c2_66 = arith.constant 2 : index
    %c1_67 = arith.constant 1 : index
    %c0_68 = arith.constant 0 : index
    %71 = vector.load %arg5[%c0_65, %c2_66, %c1_67, %c0_68] : memref<1x3x4x128xf32, #tpu.memory_space<vmem>>, vector<1x1x1x128xf32>
    %72 = vector.shape_cast %71 : vector<1x1x1x128xf32> to vector<1x128xf32>
    %73 = arith.addf %72, %58 : vector<1x128xf32>
    %c0_69 = arith.constant 0 : index
    %c2_70 = arith.constant 2 : index
    %c1_71 = arith.constant 1 : index
    %c0_72 = arith.constant 0 : index
    %74 = vector.load %arg5[%c0_69, %c2_70, %c1_71, %c0_72] : memref<1x3x4x128xf32, #tpu.memory_space<vmem>>, vector<1x1x1x128xf32>
    %75 = vector.shape_cast %74 : vector<1x1x1x128xf32> to vector<1x128xf32>
    %76 = vector.shape_cast %73 : vector<1x128xf32> to vector<1x1x1x128xf32>
    tpu.vector_store %arg5[%c0_69, %c2_70, %c1_71, %c0_72], %76 {strides = array<i32>} : memref<1x3x4x128xf32, #tpu.memory_space<vmem>>, vector<1x1x1x128xf32>,
    %c2_i32 = arith.constant 2 : i32
    %77 = vector.broadcast %c2_i32 : i32 to vector<2x128xi32>
    %78 = arith.cmpi eq, %6, %77 : vector<2x128xi32>
    %cst_73 = arith.constant 0.000000e+00 : f32
    %79 = vector.broadcast %cst_73 : f32 to vector<2x128xf32>
    %80 = arith.select %78, %12, %79 : vector<2x128xi1>, vector<2x128xf32>
    %cst_74 = arith.constant dense<0.000000e+00> : vector<128xf32>
    %81 = vector.multi_reduction <add>, %80, %cst_74 [0] : vector<2x128xf32> to vector<128xf32>
    %82 = vector.shape_cast %81 : vector<128xf32> to vector<1x128xf32>
    %83 = arith.mulf %12, %12 : vector<2x128xf32>
    %cst_75 = arith.constant dense<0.000000e+00> : vector<128xf32>
    %84 = vector.multi_reduction <add>, %83, %cst_75 [0] : vector<2x128xf32> to vector<128xf32>
    %85 = vector.shape_cast %84 : vector<128xf32> to vector<1x128xf32>
    %86 = arith.extui %78 : vector<2x128xi1> to vector<2x128xi32>
    %87 = arith.sitofp %86 : vector<2x128xi32> to vector<2x128xf32>
    %cst_76 = arith.constant dense<0.000000e+00> : vector<128xf32>
    %88 = vector.multi_reduction <add>, %87, %cst_76 [0] : vector<2x128xf32> to vector<128xf32>
    %89 = vector.shape_cast %88 : vector<128xf32> to vector<1x128xf32>
    %c0_77 = arith.constant 0 : index
    %c0_78 = arith.constant 0 : index
    %c2_79 = arith.constant 2 : index
    %c0_80 = arith.constant 0 : index
    %90 = vector.load %arg5[%c0_77, %c0_78, %c2_79, %c0_80] : memref<1x3x4x128xf32, #tpu.memory_space<vmem>>, vector<1x1x1x128xf32>
    %91 = vector.shape_cast %90 : vector<1x1x1x128xf32> to vector<1x128xf32>
    %92 = arith.addf %91, %82 : vector<1x128xf32>
    %c0_81 = arith.constant 0 : index
    %c0_82 = arith.constant 0 : index
    %c2_83 = arith.constant 2 : index
    %c0_84 = arith.constant 0 : index
    %93 = vector.load %arg5[%c0_81, %c0_82, %c2_83, %c0_84] : memref<1x3x4x128xf32, #tpu.memory_space<vmem>>, vector<1x1x1x128xf32>
    %94 = vector.shape_cast %93 : vector<1x1x1x128xf32> to vector<1x128xf32>
    %95 = vector.shape_cast %92 : vector<1x128xf32> to vector<1x1x1x128xf32>
    tpu.vector_store %arg5[%c0_81, %c0_82, %c2_83, %c0_84], %95 {strides = array<i32>} : memref<1x3x4x128xf32, #tpu.memory_space<vmem>>, vector<1x1x1x128xf32>,
    %c0_85 = arith.constant 0 : index
    %c1_86 = arith.constant 1 : index
    %c2_87 = arith.constant 2 : index
    %c0_88 = arith.constant 0 : index
    %96 = vector.load %arg5[%c0_85, %c1_86, %c2_87, %c0_88] : memref<1x3x4x128xf32, #tpu.memory_space<vmem>>, vector<1x1x1x128xf32>
    %97 = vector.shape_cast %96 : vector<1x1x1x128xf32> to vector<1x128xf32>
    %98 = arith.addf %97, %85 : vector<1x128xf32>
    %c0_89 = arith.constant 0 : index
    %c1_90 = arith.constant 1 : index
    %c2_91 = arith.constant 2 : index
    %c0_92 = arith.constant 0 : index
    %99 = vector.load %arg5[%c0_89, %c1_90, %c2_91, %c0_92] : memref<1x3x4x128xf32, #tpu.memory_space<vmem>>, vector<1x1x1x128xf32>
    %100 = vector.shape_cast %99 : vector<1x1x1x128xf32> to vector<1x128xf32>
    %101 = vector.shape_cast %98 : vector<1x128xf32> to vector<1x1x1x128xf32>
    tpu.vector_store %arg5[%c0_89, %c1_90, %c2_91, %c0_92], %101 {strides = array<i32>} : memref<1x3x4x128xf32, #tpu.memory_space<vmem>>, vector<1x1x1x128xf32>,
    %c0_93 = arith.constant 0 : index
    %c2_94 = arith.constant 2 : index
    %c2_95 = arith.constant 2 : index
    %c0_96 = arith.constant 0 : index
    %102 = vector.load %arg5[%c0_93, %c2_94, %c2_95, %c0_96] : memref<1x3x4x128xf32, #tpu.memory_space<vmem>>, vector<1x1x1x128xf32>
    %103 = vector.shape_cast %102 : vector<1x1x1x128xf32> to vector<1x128xf32>
    %104 = arith.addf %103, %89 : vector<1x128xf32>
    %c0_97 = arith.constant 0 : index
    %c2_98 = arith.constant 2 : index
    %c2_99 = arith.constant 2 : index
    %c0_100 = arith.constant 0 : index
    %105 = vector.load %arg5[%c0_97, %c2_98, %c2_99, %c0_100] : memref<1x3x4x128xf32, #tpu.memory_space<vmem>>, vector<1x1x1x128xf32>
    %106 = vector.shape_cast %105 : vector<1x1x1x128xf32> to vector<1x128xf32>
    %107 = vector.shape_cast %104 : vector<1x128xf32> to vector<1x1x1x128xf32>
    tpu.vector_store %arg5[%c0_97, %c2_98, %c2_99, %c0_100], %107 {strides = array<i32>} : memref<1x3x4x128xf32, #tpu.memory_space<vmem>>, vector<1x1x1x128xf32>,
    %c3_i32 = arith.constant 3 : i32
    %108 = vector.broadcast %c3_i32 : i32 to vector<2x128xi32>
    %109 = arith.cmpi eq, %6, %108 : vector<2x128xi32>
    %cst_101 = arith.constant 0.000000e+00 : f32
    %110 = vector.broadcast %cst_101 : f32 to vector<2x128xf32>
    %111 = arith.select %109, %14, %110 : vector<2x128xi1>, vector<2x128xf32>
    %cst_102 = arith.constant dense<0.000000e+00> : vector<128xf32>
    %112 = vector.multi_reduction <add>, %111, %cst_102 [0] : vector<2x128xf32> to vector<128xf32>
    %113 = vector.shape_cast %112 : vector<128xf32> to vector<1x128xf32>
    %114 = arith.mulf %14, %14 : vector<2x128xf32>
    %cst_103 = arith.constant dense<0.000000e+00> : vector<128xf32>
    %115 = vector.multi_reduction <add>, %114, %cst_103 [0] : vector<2x128xf32> to vector<128xf32>
    %116 = vector.shape_cast %115 : vector<128xf32> to vector<1x128xf32>
    %117 = arith.extui %109 : vector<2x128xi1> to vector<2x128xi32>
    %118 = arith.sitofp %117 : vector<2x128xi32> to vector<2x128xf32>
    %cst_104 = arith.constant dense<0.000000e+00> : vector<128xf32>
    %119 = vector.multi_reduction <add>, %118, %cst_104 [0] : vector<2x128xf32> to vector<128xf32>
    %120 = vector.shape_cast %119 : vector<128xf32> to vector<1x128xf32>
    %c0_105 = arith.constant 0 : index
    %c0_106 = arith.constant 0 : index
    %c3_107 = arith.constant 3 : index
    %c0_108 = arith.constant 0 : index
    %121 = vector.load %arg5[%c0_105, %c0_106, %c3_107, %c0_108] : memref<1x3x4x128xf32, #tpu.memory_space<vmem>>, vector<1x1x1x128xf32>
    %122 = vector.shape_cast %121 : vector<1x1x1x128xf32> to vector<1x128xf32>
    %123 = arith.addf %122, %113 : vector<1x128xf32>
    %c0_109 = arith.constant 0 : index
    %c0_110 = arith.constant 0 : index
    %c3_111 = arith.constant 3 : index
    %c0_112 = arith.constant 0 : index
    %124 = vector.load %arg5[%c0_109, %c0_110, %c3_111, %c0_112] : memref<1x3x4x128xf32, #tpu.memory_space<vmem>>, vector<1x1x1x128xf32>
    %125 = vector.shape_cast %124 : vector<1x1x1x128xf32> to vector<1x128xf32>
    %126 = vector.shape_cast %123 : vector<1x128xf32> to vector<1x1x1x128xf32>
    tpu.vector_store %arg5[%c0_109, %c0_110, %c3_111, %c0_112], %126 {strides = array<i32>} : memref<1x3x4x128xf32, #tpu.memory_space<vmem>>, vector<1x1x1x128xf32>,
    %c0_113 = arith.constant 0 : index
    %c1_114 = arith.constant 1 : index
    %c3_115 = arith.constant 3 : index
    %c0_116 = arith.constant 0 : index
    %127 = vector.load %arg5[%c0_113, %c1_114, %c3_115, %c0_116] : memref<1x3x4x128xf32, #tpu.memory_space<vmem>>, vector<1x1x1x128xf32>
    %128 = vector.shape_cast %127 : vector<1x1x1x128xf32> to vector<1x128xf32>
    %129 = arith.addf %128, %116 : vector<1x128xf32>
    %c0_117 = arith.constant 0 : index
    %c1_118 = arith.constant 1 : index
    %c3_119 = arith.constant 3 : index
    %c0_120 = arith.constant 0 : index
    %130 = vector.load %arg5[%c0_117, %c1_118, %c3_119, %c0_120] : memref<1x3x4x128xf32, #tpu.memory_space<vmem>>, vector<1x1x1x128xf32>
    %131 = vector.shape_cast %130 : vector<1x1x1x128xf32> to vector<1x128xf32>
    %132 = vector.shape_cast %129 : vector<1x128xf32> to vector<1x1x1x128xf32>
    tpu.vector_store %arg5[%c0_117, %c1_118, %c3_119, %c0_120], %132 {strides = array<i32>} : memref<1x3x4x128xf32, #tpu.memory_space<vmem>>, vector<1x1x1x128xf32>,
    %c0_121 = arith.constant 0 : index
    %c2_122 = arith.constant 2 : index
    %c3_123 = arith.constant 3 : index
    %c0_124 = arith.constant 0 : index
    %133 = vector.load %arg5[%c0_121, %c2_122, %c3_123, %c0_124] : memref<1x3x4x128xf32, #tpu.memory_space<vmem>>, vector<1x1x1x128xf32>
    %134 = vector.shape_cast %133 : vector<1x1x1x128xf32> to vector<1x128xf32>
    %135 = arith.addf %134, %120 : vector<1x128xf32>
    %c0_125 = arith.constant 0 : index
    %c2_126 = arith.constant 2 : index
    %c3_127 = arith.constant 3 : index
    %c0_128 = arith.constant 0 : index
    %136 = vector.load %arg5[%c0_125, %c2_126, %c3_127, %c0_128] : memref<1x3x4x128xf32, #tpu.memory_space<vmem>>, vector<1x1x1x128xf32>
    %137 = vector.shape_cast %136 : vector<1x1x1x128xf32> to vector<1x128xf32>
    %138 = vector.shape_cast %135 : vector<1x128xf32> to vector<1x1x1x128xf32>
    tpu.vector_store %arg5[%c0_125, %c2_126, %c3_127, %c0_128], %138 {strides = array<i32>} : memref<1x3x4x128xf32, #tpu.memory_space<vmem>>, vector<1x1x1x128xf32>,
    return
  }
  func.func @transform_0(%arg0: i32, %arg1: i32, %arg2: i32) -> (i32, i32, i32, i32) {
    %c1_i32 = arith.constant 1 : i32
    %0 = arith.muli %arg0, %c1_i32 : i32
    %1 = arith.addi %0, %arg2 : i32
    %c0_i32 = arith.constant 0 : i32
    %2 = arith.minsi %1, %c0_i32 : i32
    %c0_i32_0 = arith.constant 0 : i32
    %c0_i32_1 = arith.constant 0 : i32
    %c0_i32_2 = arith.constant 0 : i32
    return %arg1, %c0_i32_0, %2, %c0_i32_1 : i32, i32, i32, i32
  }
  func.func @transform_1(%arg0: i32, %arg1: i32, %arg2: i32) -> (i32, i32, i32) {
    %c1_i32 = arith.constant 1 : i32
    %0 = arith.muli %arg0, %c1_i32 : i32
    %1 = arith.addi %0, %arg2 : i32
    %c0_i32 = arith.constant 0 : i32
    %2 = arith.minsi %1, %c0_i32 : i32
    %c0_i32_0 = arith.constant 0 : i32
    %c0_i32_1 = arith.constant 0 : i32
    return %arg1, %2, %c0_i32_0 : i32, i32, i32
  }
  func.func @transform_2(%arg0: i32, %arg1: i32, %arg2: i32) -> (i32, i32, i32, i32) {
    %c0_i32 = arith.constant 0 : i32
    %c0_i32_0 = arith.constant 0 : i32
    %c0_i32_1 = arith.constant 0 : i32
    %c0_i32_2 = arith.constant 0 : i32
    return %arg0, %c0_i32, %c0_i32_0, %c0_i32_1 : i32, i32, i32, i32
  }
}

</mosaic_0001>

<llo_original>
// kernel: tpu_custom_call.1
$region0: #{tpu_custom_call.1}
  #allocation0 [shape = 'u32[]', space=smem, size = 0x4, offset = 0x4, fixed_abs, tag = 'smem constant byte address 0x4 - core index']
  #allocation1 [shape = 'u32[72,128]{1,0:T(1,128)}', space=vmem, size = 0x9000, scoped, tag = 'internal scratch']
  %s0 = inlined_call_operand.hbm [shape: f32[2,4,2,128], index: 0, kind: input, shape index: {}]
  %s1 = inlined_call_operand.hbm [shape: s32[2,2,128], index: 1, kind: input, shape index: {}]
  %s2 = inlined_call_operand.hbm [shape: f32[1,3,4,128], index: 2, kind: output, shape index: {}]
  %s3 = sld [smem:[#allocation0]]
  $region53: #{tpu_custom_call.1} parent=0
    _
  %s5 = ssub.s32 1, %s3
  %s6 = scalar_select 0, %s5, %s3
  $region1: #{tpu_custom_call.1} parent=0
    #allocation2 [shape = 'u8[8192]{0}', space=vmem, size = 0x2000, scoped, tag = 'input window, operand 0']
    #allocation3 [shape = 's32[2]{0}', space=sflag, size = 0x8, scoped, tag = 'scoped memory for tpu_custom_call.1']
    #allocation4 [shape = 's32[2]{0}', space=sflag, size = 0x8, scoped, tag = 'scoped memory for tpu_custom_call.1']
    #allocation5 [shape = 'u8[2048]{0}', space=vmem, size = 0x800, scoped, tag = 'input window, operand 1']
    #allocation6 [shape = 's32[2]{0}', space=sflag, size = 0x8, scoped, tag = 'scoped memory for tpu_custom_call.1']
    #allocation7 [shape = 'u8[6144]{0}', space=vmem, size = 0x1800, scoped, tag = 'output window, operand 0, single buffered']
    %7 = vsyncpa [#allocation3], 0
    %s8 = scalar_lea.sflag [#allocation3], 1
    %9 = vsyncpa %s8, 0
    %10 = vsyncpa [#allocation6], 0
    %s11 = scalar_lea.sflag [#allocation6], 1
    %12 = vsyncpa %s11, 0
    %13 = vsyncpa [#allocation4], 0
    loop: start=0, step=1, limit=4
    $region2: #{tpu_custom_call.1} parent=1 // loop_pre_header
      _
    $region3: #{tpu_custom_call.1} parent=1 // loop_header
      %s15 = sphi 0, %s19
      %p16 = scmp.ge.s32.totalorder %s15, 4
      %s22 = sphi 0, %s41
      %s23 = sphi 0, %s37
      %s24 = sphi 0, %s33
      %s25 = sphi 0, %s22
      %s26 = sphi 0, %s23
      %s27 = sphi 0, %s24
      %s28 = sphi 0, %s25
      %s29 = sphi 0, %s26
      %s30 = sphi 0, %s27
      %s52 = sphi 0, %s54
      %s55 = sphi 0, %s52
      %s56 = sphi 0, %s55
      %s72 = sphi 0, %s56
      %s86 = sphi 0, %s88
      %s89 = sphi 0, %s86
      %s90 = sphi 0, %s89
      %s106 = sphi 0, %s90
      %s112 = sphi 0, %s114
      %s115 = sphi 0, %s112
      %s116 = sphi 0, %s115
      %s132 = sphi 0, %s116
    $region4: #{tpu_custom_call.1} parent=1 // loop_header_branch
      %18 = sbr.rel (%p16) target = $region8
    $region5: #{tpu_custom_call.1} parent=1 // loop_body
      %s20 = ssub.s32 %s15, 1
      %s21 = ssub.s32 %s15, 2
      %s31 = sadd.s32 1, %s24
      %p32 = scmp.ge.s32.totalorder %s31, 1
      %s33 = scalar_select %p32, 0, %s31
      %s34 = sadd.s32 1, %s23
      %s35 = scalar_select %p32, %s34, %s23
      %p36 = scmp.ge.s32.totalorder %s35, 2
      %s37 = scalar_select %p36, 0, %s35
      %s38 = sadd.s32 1, %s22
      %s39 = scalar_select %p36, %s38, %s22
      %p40 = scmp.ge.s32.totalorder %s39, 1
      %s41 = scalar_select %p40, 0, %s39
      %s42 = sadd.s32 %s22, %s24
      %p43 = scmp.lt.s32.totalorder %s42, 0
      %s44 = scalar_select %p43, %s42, 0
      %s45 = sadd.s32 %s41, %s33
      %p46 = scmp.lt.s32.totalorder %s45, 0
      %s47 = scalar_select %p46, %s45, 0
      %s48 = ssub.s32 %s23, %s37
      %s49 = ssub.s32 %s44, %s47
      %s50 = sor.u32 %s48, %s49
      %p51 = scmp.eq.s32.totalorder %s50, 0
      %s53 = sadd.s32 %s52, 1
      %s54 = scalar_select %p51, %s52, %s53
      %p57 = pneg %p51
      %p58 = scmp.eq.s32.totalorder %s15, 1
      %p59 = por %p57, %p58
      %p60 = scmp.ne.s32.totalorder %s52, %s55
      %p61 = scmp.eq.s32.totalorder %s15, 0
      %p62 = por %p60, %p61
      %p63 = scmp.ne.s32.totalorder %s52, %s55
      %p64 = scmp.eq.s32.totalorder %s20, 1
      %p65 = por %p63, %p64
      %p66 = scmp.ne.s32.totalorder %s55, %s56
      %p67 = scmp.eq.s32.totalorder %s20, 0
      %p68 = por %p66, %p67
      %p69 = scmp.ne.s32.totalorder %s55, %s56
      %p70 = scmp.eq.s32.totalorder %s21, 1
      %p71 = por %p69, %p70
      %p73 = scmp.ne.s32.totalorder %s56, %s72
      %p74 = scmp.eq.s32.totalorder %s21, 0
      %p75 = por %p73, %p74
      %s76 = sadd.s32 %s22, %s24
      %p77 = scmp.lt.s32.totalorder %s76, 0
      %s78 = scalar_select %p77, %s76, 0
      %s79 = sadd.s32 %s41, %s33
      %p80 = scmp.lt.s32.totalorder %s79, 0
      %s81 = scalar_select %p80, %s79, 0
      %s82 = ssub.s32 %s23, %s37
      %s83 = ssub.s32 %s78, %s81
      %s84 = sor.u32 %s82, %s83
      %p85 = scmp.eq.s32.totalorder %s84, 0
      %s87 = sadd.s32 %s86, 1
      %s88 = scalar_select %p85, %s86, %s87
      %p91 = pneg %p85
      %p92 = scmp.eq.s32.totalorder %s15, 1
      %p93 = por %p91, %p92
      %p94 = scmp.ne.s32.totalorder %s86, %s89
      %p95 = scmp.eq.s32.totalorder %s15, 0
      %p96 = por %p94, %p95
      %p97 = scmp.ne.s32.totalorder %s86, %s89
      %p98 = scmp.eq.s32.totalorder %s20, 1
      %p99 = por %p97, %p98
      %p100 = scmp.ne.s32.totalorder %s89, %s90
      %p101 = scmp.eq.s32.totalorder %s20, 0
      %p102 = por %p100, %p101
      %p103 = scmp.ne.s32.totalorder %s89, %s90
      %p104 = scmp.eq.s32.totalorder %s21, 1
      %p105 = por %p103, %p104
      %p107 = scmp.ne.s32.totalorder %s90, %s106
      %p108 = scmp.eq.s32.totalorder %s21, 0
      %p109 = por %p107, %p108
      %s110 = ssub.s32 %s22, %s41
      %p111 = scmp.eq.s32.totalorder %s110, 0
      %s113 = sadd.s32 %s112, 1
      %s114 = scalar_select %p111, %s112, %s113
      %p117 = pneg %p111
      %p118 = scmp.eq.s32.totalorder %s15, 1
      %p119 = por %p117, %p118
      %p120 = scmp.ne.s32.totalorder %s112, %s115
      %p121 = scmp.eq.s32.totalorder %s15, 0
      %p122 = por %p120, %p121
      %p123 = scmp.ne.s32.totalorder %s112, %s115
      %p124 = scmp.eq.s32.totalorder %s20, 1
      %p125 = por %p123, %p124
      %p126 = scmp.ne.s32.totalorder %s115, %s116
      %p127 = scmp.eq.s32.totalorder %s20, 0
      %p128 = por %p126, %p127
      %p129 = scmp.ne.s32.totalorder %s115, %s116
      %p130 = scmp.eq.s32.totalorder %s21, 1
      %p131 = por %p129, %p130
      %p133 = scmp.ne.s32.totalorder %s116, %s132
      %p134 = scmp.eq.s32.totalorder %s21, 0
      %p135 = por %p133, %p134
      %p136 = scmp.le.s32.totalorder 1, %s15
      %p137 = scmp.lt.s32.totalorder %s15, 3
      %p138 = pnand %p136, %p137
      %p139 = pneg %p138
      // Predicated region
      $region9: #{tpu_custom_call.1} parent=5 // pred_check
        _
      $region10: #{tpu_custom_call.1} parent=5 // pred_check_branch
        %141 = sbr.rel (%p138) target = $region12
      $region11: #{tpu_custom_call.1} parent=5 // pred_region
        %s142 = ssub.s32 %s15, 1
      $region12: #{tpu_custom_call.1} parent=5 // pred_fallthru
        _
      %p143 = scmp.lt.s32.totalorder %s15, 2
      // Predicated region
      $region13: #{tpu_custom_call.1} parent=5 // pred_check
        %p144 = pneg %p143
      $region14: #{tpu_custom_call.1} parent=5 // pred_check_branch
        %146 = sbr.rel (%p144) target = $region16
      $region15: #{tpu_custom_call.1} parent=5 // pred_region
        // Predicated region
        $region17: #{tpu_custom_call.1} parent=15 // pred_check
          %p147 = pneg %p62
        $region18: #{tpu_custom_call.1} parent=15 // pred_check_branch
          %149 = sbr.rel (%p147) target = $region20
        $region19: #{tpu_custom_call.1} parent=15 // pred_region
          %s150 = sand.u32 %s52, 1
          %s151 = scalar_lea.sflag [#allocation3], %s150
          %s152 = sand.u32 %s52, 1
          %s153 = smul.addr %s152, 8
          %s154 = scalar_lea.vmem [#allocation2], %s153
          %s155 = sadd.s32 %s22, %s24
          %p156 = scmp.lt.s32.totalorder %s155, 0
          %s157 = scalar_select %p156, %s155, 0
          %159 = vsyncadd %s151, 0
          %s160 = smul.addr %s23, 4
          %s161 = sadd.s32 %s157, %s160
          %s162 = smul.addr %s161, 2
          %s163 = scalar_lea.hbm %s0, %s162
          %s164 = sshll.u32 %s163, 4
          %s165 = int_to_ptr.hbm [resolvable:$true] %s164
          %s166 = sshll.u32 %s154, 4
          %s167 = int_to_ptr.vmem [resolvable:$true] %s166
          %172 = dma.hbm_to_vmem [thread:$0]  %s165, 128, %s167, %s151, 32, 32, 2
        $region20: #{tpu_custom_call.1} parent=15 // pred_fallthru
          _
        // Predicated region
        $region21: #{tpu_custom_call.1} parent=15 // pred_check
          %p173 = pneg %p96
        $region22: #{tpu_custom_call.1} parent=15 // pred_check_branch
          %175 = sbr.rel (%p173) target = $region24
        $region23: #{tpu_custom_call.1} parent=15 // pred_region
          %s176 = sand.u32 %s86, 1
          %s177 = scalar_lea.sflag [#allocation6], %s176
          %s178 = sand.u32 %s86, 1
          %s179 = smul.addr %s178, 2
          %s180 = scalar_lea.vmem [#allocation5], %s179
          %s181 = sadd.s32 %s22, %s24
          %p182 = scmp.lt.s32.totalorder %s181, 0
          %s183 = scalar_select %p182, %s181, 0
          %185 = vsyncadd %s177, 0
          %s186 = sadd.s32 %s183, %s23
          %s187 = smul.addr %s186, 2
          %s188 = scalar_lea.hbm %s1, %s187
          %s190 = sshll.u32 %s188, 4
          %s191 = int_to_ptr.hbm [resolvable:$true] %s190
          %s192 = sshll.u32 %s180, 4
          %s193 = int_to_ptr.vmem [resolvable:$true] %s192
          %195 = dma.hbm_to_vmem [thread:$0]  %s191, 32, %s193, %s177
        $region24: #{tpu_custom_call.1} parent=15 // pred_fallthru
          _
      $region16: #{tpu_custom_call.1} parent=5 // pred_fallthru
        _
      %p196 = scmp.le.s32.totalorder 1, %s15
      %p197 = scmp.lt.s32.totalorder %s15, 3
      %p198 = pnand %p196, %p197
      %p199 = pneg %p198
      // Predicated region
      $region25: #{tpu_custom_call.1} parent=5 // pred_check
        _
      $region26: #{tpu_custom_call.1} parent=5 // pred_check_branch
        %201 = sbr.rel (%p198) target = $region28
      $region27: #{tpu_custom_call.1} parent=5 // pred_region
        %s202 = ssub.s32 %s15, 1
        %s203 = sand.u32 %s55, 1
        %s204 = scalar_lea.sflag [#allocation3], %s203
        %s205 = sand.u32 %s55, 1
        %s206 = smul.addr %s205, 8
        %s207 = scalar_lea.vmem [#allocation2], %s206
        // Predicated region
        $region29: #{tpu_custom_call.1} parent=27 // pred_check
          %p208 = pneg %p68
        $region30: #{tpu_custom_call.1} parent=27 // pred_check_branch
          %210 = sbr.rel (%p208) target = $region32
        $region31: #{tpu_custom_call.1} parent=27 // pred_region
          %212 = dma.done %s204, 128
        $region32: #{tpu_custom_call.1} parent=27 // pred_fallthru
          _
        %s213 = sand.u32 %s89, 1
        %s214 = scalar_lea.sflag [#allocation6], %s213
        %s215 = sand.u32 %s89, 1
        %s216 = smul.addr %s215, 2
        %s217 = scalar_lea.vmem [#allocation5], %s216
        // Predicated region
        $region33: #{tpu_custom_call.1} parent=27 // pred_check
          %p218 = pneg %p102
        $region34: #{tpu_custom_call.1} parent=27 // pred_check_branch
          %220 = sbr.rel (%p218) target = $region36
        $region35: #{tpu_custom_call.1} parent=27 // pred_region
          %222 = dma.done %s214, 32
        $region36: #{tpu_custom_call.1} parent=27 // pred_fallthru
          _
        %s223 = sand.u32 %s55, 1
        %s224 = scalar_lea.sflag [#allocation3], %s223
        %s225 = sand.u32 %s55, 1
        %s226 = smul.addr %s225, 8
        %s227 = scalar_lea.vmem [#allocation2], %s226
        %p228 = pneg %p68
        %p229 = pneg %p65
        %s230 = sand.u32 %s89, 1
        %s231 = scalar_lea.sflag [#allocation6], %s230
        %s232 = sand.u32 %s89, 1
        %s233 = smul.addr %s232, 2
        %s234 = scalar_lea.vmem [#allocation5], %s233
        %p235 = pneg %p102
        %p236 = pneg %p99
        %p237 = pneg %p128
        %p238 = pneg %p125
        %s239 = sadd.s32 %s25, %s27
        %p240 = scmp.lt.s32.totalorder %s239, 0
        %s241 = scalar_select %p240, %s239, 0
        %s242 = sadd.s32 %s25, %s27
        %p243 = scmp.lt.s32.totalorder %s242, 0
        %s244 = scalar_select %p243, %s242, 0
        %p245 = scmp.eq.s32.totalorder %s26, 0
        %p246 = scmp.eq.s32.totalorder %s27, 0
        %p247 = pnand %p245, %p246
        %p248 = pneg %p247
        // Predicated region
        $region37: #{tpu_custom_call.1} parent=27 // pred_check
          _
        $region38: #{tpu_custom_call.1} parent=27 // pred_check_branch
          %250 = sbr.rel (%p247) target = $region40
        $region39: #{tpu_custom_call.1} parent=27 // pred_region
          %251 = vst [vmem:[#allocation7] sm:$0xf] 0.0
          %252 = vst [vmem:[#allocation7 + $0x4] sm:$0xf] 0.0
          %253 = vst [vmem:[#allocation7 + $0x8] sm:$0xf] 0.0
        $region40: #{tpu_custom_call.1} parent=27 // pred_fallthru
          _
        %v254 = vld [vmem:[%s217] sm:$0x3]
        %v255 = vld [vmem:[%s207] sm:$0x3]
        %s256 = scalar_lea.vmem %s207, 2 [#allocation2]
        %v257 = vld [vmem:[%s256] sm:$0x3]
        %s258 = scalar_lea.vmem %s207, 4 [#allocation2]
        %v259 = vld [vmem:[%s258] sm:$0x3]
        %s260 = scalar_lea.vmem %s207, 6 [#allocation2]
        %v261 = vld [vmem:[%s260] sm:$0x3]
        %vm262 = vcmp.eq.s32.totalorder %v254, 0
        %v263 = vsel %vm262, %v255, 0.0
        %vm264 = vcmask 1041408
        %v265 = vsel %vm264, %v263, 0.0
        %v266 = vrot.slane %v265, 4
        %v267 = vadd.f32 %v265, %v266
        %v268 = vrot.slane %v267, 2
        %v269 = vadd.f32 %v267, %v268
        %v270 = vrot.slane %v269, 1
        %v271 = vadd.f32 %v269, %v270
        %v272 = vmul.f32 %v255, %v255
        %v273 = vsel %vm264, %v272, 0.0
        %v274 = vrot.slane %v273, 4
        %v275 = vadd.f32 %v273, %v274
        %v276 = vrot.slane %v275, 2
        %v277 = vadd.f32 %v275, %v276
        %v278 = vrot.slane %v277, 1
        %v279 = vadd.f32 %v277, %v278
        %v280 = vsel %vm262, 1, 0
        %v281 = vcvt.s32.f32 %v280
        %v282 = vsel %vm264, %v281, 0.0
        %v283 = vrot.slane %v282, 4
        %v284 = vadd.f32 %v282, %v283
        %v285 = vrot.slane %v284, 2
        %v286 = vadd.f32 %v284, %v285
        %v287 = vrot.slane %v286, 1
        %v288 = vadd.f32 %v286, %v287
        %v289 = vld [vmem:[#allocation7] sm:$0x1]
        %v290 = vadd.f32 %v289, %v271
        %291 = vst [vmem:[#allocation7] sm:$0x1] %v290
        %s292 = scalar_lea.vmem [#allocation7], 4
        %v293 = vld [vmem:[%s292] sm:$0x1]
        %v294 = vadd.f32 %v293, %v279
        %295 = vst [vmem:[%s292] sm:$0x1] %v294
        %s296 = scalar_lea.vmem [#allocation7], 8
        %v297 = vld [vmem:[%s296] sm:$0x1]
        %v298 = vadd.f32 %v297, %v288
        %299 = vst [vmem:[%s296] sm:$0x1] %v298
        %vm300 = vcmp.eq.s32.totalorder %v254, 1
        %v301 = vsel %vm300, %v257, 0.0
        %v302 = vsel %vm264, %v301, 0.0
        %v303 = vrot.slane %v302, 4
        %v304 = vadd.f32 %v302, %v303
        %v305 = vrot.slane %v304, 2
        %v306 = vadd.f32 %v304, %v305
        %v307 = vrot.slane %v306, 1
        %v308 = vadd.f32 %v306, %v307
        %v309 = vmul.f32 %v257, %v257
        %v310 = vsel %vm264, %v309, 0.0
        %v311 = vrot.slane %v310, 4
        %v312 = vadd.f32 %v310, %v311
        %v313 = vrot.slane %v312, 2
        %v314 = vadd.f32 %v312, %v313
        %v315 = vrot.slane %v314, 1
        %v316 = vadd.f32 %v314, %v315
        %v317 = vsel %vm300, 1, 0
        %v318 = vcvt.s32.f32 %v317
        %v319 = vsel %vm264, %v318, 0.0
        %v320 = vrot.slane %v319, 4
        %v321 = vadd.f32 %v319, %v320
        %v322 = vrot.slane %v321, 2
        %v323 = vadd.f32 %v321, %v322
        %v324 = vrot.slane %v323, 1
        %v325 = vadd.f32 %v323, %v324
        %v326 = vld [vmem:[#allocation7 + $0x1] sm:$0x1]
        %v327 = vadd.f32 %v326, %v308
        %328 = vst [vmem:[#allocation7 + $0x1] sm:$0x1] %v327
        %v329 = vld [vmem:[%s292 + $0x1] sm:$0x1]
        %v330 = vadd.f32 %v329, %v316
        %331 = vst [vmem:[%s292 + $0x1] sm:$0x1] %v330
        %v332 = vld [vmem:[%s296 + $0x1] sm:$0x1]
        %v333 = vadd.f32 %v332, %v325
        %334 = vst [vmem:[%s296 + $0x1] sm:$0x1] %v333
        %vm335 = vcmp.eq.s32.totalorder %v254, 2
        %v336 = vsel %vm335, %v259, 0.0
        %v337 = vsel %vm264, %v336, 0.0
        %v338 = vrot.slane %v337, 4
        %v339 = vadd.f32 %v337, %v338
        %v340 = vrot.slane %v339, 2
        %v341 = vadd.f32 %v339, %v340
        %v342 = vrot.slane %v341, 1
        %v343 = vadd.f32 %v341, %v342
        %v344 = vmul.f32 %v259, %v259
        %v345 = vsel %vm264, %v344, 0.0
        %v346 = vrot.slane %v345, 4
        %v347 = vadd.f32 %v345, %v346
        %v348 = vrot.slane %v347, 2
        %v349 = vadd.f32 %v347, %v348
        %v350 = vrot.slane %v349, 1
        %v351 = vadd.f32 %v349, %v350
        %v352 = vsel %vm335, 1, 0
        %v353 = vcvt.s32.f32 %v352
        %v354 = vsel %vm264, %v353, 0.0
        %v355 = vrot.slane %v354, 4
        %v356 = vadd.f32 %v354, %v355
        %v357 = vrot.slane %v356, 2
        %v358 = vadd.f32 %v356, %v357
        %v359 = vrot.slane %v358, 1
        %v360 = vadd.f32 %v358, %v359
        %v361 = vld [vmem:[#allocation7 + $0x2] sm:$0x1]
        %v362 = vadd.f32 %v361, %v343
        %363 = vst [vmem:[#allocation7 + $0x2] sm:$0x1] %v362
        %v364 = vld [vmem:[%s292 + $0x2] sm:$0x1]
        %v365 = vadd.f32 %v364, %v351
        %366 = vst [vmem:[%s292 + $0x2] sm:$0x1] %v365
        %v367 = vld [vmem:[%s296 + $0x2] sm:$0x1]
        %v368 = vadd.f32 %v367, %v360
        %369 = vst [vmem:[%s296 + $0x2] sm:$0x1] %v368
        %vm370 = vcmp.eq.s32.totalorder %v254, 3
        %v371 = vsel %vm370, %v261, 0.0
        %v372 = vsel %vm264, %v371, 0.0
        %v373 = vrot.slane %v372, 4
        %v374 = vadd.f32 %v372, %v373
        %v375 = vrot.slane %v374, 2
        %v376 = vadd.f32 %v374, %v375
        %v377 = vrot.slane %v376, 1
        %v378 = vadd.f32 %v376, %v377
        %v379 = vmul.f32 %v261, %v261
        %v380 = vsel %vm264, %v379, 0.0
        %v381 = vrot.slane %v380, 4
        %v382 = vadd.f32 %v380, %v381
        %v383 = vrot.slane %v382, 2
        %v384 = vadd.f32 %v382, %v383
        %v385 = vrot.slane %v384, 1
        %v386 = vadd.f32 %v384, %v385
        %v387 = vsel %vm370, 1, 0
        %v388 = vcvt.s32.f32 %v387
        %v389 = vsel %vm264, %v388, 0.0
        %v390 = vrot.slane %v389, 4
        %v391 = vadd.f32 %v389, %v390
        %v392 = vrot.slane %v391, 2
        %v393 = vadd.f32 %v391, %v392
        %v394 = vrot.slane %v393, 1
        %v395 = vadd.f32 %v393, %v394
        %v396 = vld [vmem:[#allocation7 + $0x3] sm:$0x1]
        %v397 = vadd.f32 %v396, %v378
        %398 = vst [vmem:[#allocation7 + $0x3] sm:$0x1] %v397
        %v399 = vld [vmem:[%s292 + $0x3] sm:$0x1]
        %v400 = vadd.f32 %v399, %v386
        %401 = vst [vmem:[%s292 + $0x3] sm:$0x1] %v400
        %v402 = vld [vmem:[%s296 + $0x3] sm:$0x1]
        %v403 = vadd.f32 %v402, %v395
        %404 = vst [vmem:[%s296 + $0x3] sm:$0x1] %v403
        // Predicated region
        $region41: #{tpu_custom_call.1} parent=27 // pred_check
          %p405 = pneg %p125
        $region42: #{tpu_custom_call.1} parent=27 // pred_check_branch
          %407 = sbr.rel (%p405) target = $region44
        $region43: #{tpu_custom_call.1} parent=27 // pred_region
          %409 = vsyncadd [#allocation4], 0
          %s410 = smul.addr %s25, 3
          %s411 = smul.addr %s410, 4
          %s412 = scalar_lea.hbm %s2, %s411
          %s413 = sshll.u32 [#allocation7], 4
          %s414 = int_to_ptr.vmem [resolvable:$true] %s413
          %s415 = sshll.u32 %s412, 4
          %s416 = int_to_ptr.hbm [resolvable:$true] %s415
          %421 = dma.vmem_to_hbm [thread:$0]  %s414, 192, %s416, [#allocation4], 64, 64, 4
        $region44: #{tpu_custom_call.1} parent=27 // pred_fallthru
          _
        // Predicated region
        $region45: #{tpu_custom_call.1} parent=27 // pred_check
          %p422 = pneg %p125
        $region46: #{tpu_custom_call.1} parent=27 // pred_check_branch
          %424 = sbr.rel (%p422) target = $region48
        $region47: #{tpu_custom_call.1} parent=27 // pred_region
          %426 = dma.done [#allocation4], 192
        $region48: #{tpu_custom_call.1} parent=27 // pred_fallthru
          _
      $region28: #{tpu_custom_call.1} parent=5 // pred_fallthru
        _
      %p427 = scmp.le.s32.totalorder 2, %s15
      // Predicated region
      $region49: #{tpu_custom_call.1} parent=5 // pred_check
        %p428 = pneg %p427
      $region50: #{tpu_custom_call.1} parent=5 // pred_check_branch
        %430 = sbr.rel (%p428) target = $region52
      $region51: #{tpu_custom_call.1} parent=5 // pred_region
        %s431 = ssub.s32 %s15, 2
      $region52: #{tpu_custom_call.1} parent=5 // pred_fallthru
        _
    $region6: #{tpu_custom_call.1} parent=1 // loop_footer
      %s19 = sadd.s32 1, %s15
    $region7: #{tpu_custom_call.1} parent=1 // loop_footer_branch
      %14 = sbr.rel target = $region3
    $region8: #{tpu_custom_call.1} parent=1 // loop_exit
      _
    %432 = vsyncpa [#allocation3], 1
    %s433 = scalar_lea.sflag [#allocation3], 1
    %434 = vsyncpa %s433, 1
    %435 = vsyncpa [#allocation6], 1
    %s436 = scalar_lea.sflag [#allocation6], 1
    %437 = vsyncpa %s436, 1
    %438 = vsyncpa [#allocation4], 1
    %s439 = scalar_lea.sflag [#allocation4], 1
    %440 = vsyncpa %s439, 1

</llo_original>
